<compile_context>
chip_gen: v5e
topology: v5e:2x2
jax: 0.10.0
libtpu: 0.0.40
codegen_flags: <defaults>
</compile_context>

<pallas_src>
import math

import jax
import jax.numpy as jnp
from jax.experimental import pallas as pl
from jax.experimental.pallas import tpu as pltpu


def _round_up(x, m):
    return ((x + m - 1) // m) * m


def _ceil_div(a, b):
    return -(-a // b)


# ------------------------------------------------------------------ kernel ---

def make_densenet_kernel(n_layers, compute_dtype):

    def kernel(*refs):
        # refs: x, (W_i, b_i) * n_layers, W_final, b_final, out
        x_ref = refs[0]
        layer_refs = refs[1:1 + 2 * n_layers]
        wf_ref = refs[1 + 2 * n_layers]
        bf_ref = refs[2 + 2 * n_layers]
        out_ref = refs[3 + 2 * n_layers]

        # Running feature vector as a single lane-concatenated bf16 value,
        # newest block first == torch.cat([y_{i-1}, ..., y_0, x], dim=1).
        feat = x_ref[...]                                   # (TB, n_input) bf16

        for i in range(n_layers):
            w_ref = layer_refs[2 * i]                       # (d_i, n_hidden) bf16
            b_ref = layer_refs[2 * i + 1]                   # (1, n_hidden)   f32
            # Single full-K dot per layer; f32 accumulation on the MXU.
            acc = jnp.dot(feat, w_ref[...],
                          preferred_element_type=jnp.float32)
            y = jnp.maximum(acc + b_ref[...], 0.0)          # f32 bias + ReLU (v5e-safe)
            # Prepend the new 32-lane block (XLU lane placement, no VMEM).
            feat = jnp.concatenate([y.astype(compute_dtype), feat], axis=1)

        # Final linear (+ Tanh): one K=d_total dot, lane-dense 128-wide bf16 store.
        accf = jnp.dot(feat, wf_ref[...], preferred_element_type=jnp.float32)
        out_ref[...] = jnp.tanh(accf + bf_ref[...]).astype(out_ref.dtype)

    return kernel


# ----------------------------------------------------------------- wrapper ---

def densenet_forward(x, dense_params, final_params,
                     n_input, n_hidden, n_layers, last_dim,
                     *, block_b=256, compute_dtype=jnp.bfloat16,
                     out_store_dtype=jnp.bfloat16):
    """x: any shape (B, ...) flattening to (B, n_input).  Params in PyTorch
    layout (W: (out, in), b: (out,)).  Returns (B, last_dim) float32."""
    B = x.shape[0]
    # Ship x to the kernel already in bf16: halves DMA bytes, bit-identical
    # since the matmul operands are bf16 either way.
    x2d = x.reshape(B, -1).astype(compute_dtype)
    assert x2d.shape[1] == n_input
    d_total = n_input + n_layers * n_hidden

    # Lane-dense output: pad last_dim up to a multiple of 128 lanes.
    last_pad = _round_up(last_dim, 128)

    # Batch tiling: bf16 packs 16 sublanes/vreg -> tb multiple of 16; force at
    # least 2 grid steps when the batch allows it so the "parallel" axis can
    # shard across v7x's two TensorCores (and pipeline DMA for large B).
    b_units = _round_up(B, 16)
    n_steps = max(1, _ceil_div(b_units, block_b))
    if n_steps == 1 and b_units >= 32:
        n_steps = 2
    tb = _round_up(_ceil_div(b_units, n_steps), 16)
    b_pad = _round_up(b_units, tb)
    if b_pad != B:
        x2d = jnp.pad(x2d, ((0, b_pad - B), (0, 0)))

    inputs = [x2d]
    for (w, b) in dense_params:
        inputs.append(jnp.transpose(w).astype(compute_dtype))    # (d_i, n_hidden)
        inputs.append(b.reshape(1, -1).astype(jnp.float32))      # (1, n_hidden)
    wf, bf = final_params
    wf_t = jnp.transpose(wf).astype(compute_dtype)               # (d_total, last_dim)
    wf_t = jnp.pad(wf_t, ((0, 0), (0, last_pad - last_dim)))     # zero output lanes
    bf_p = jnp.pad(bf.reshape(1, -1).astype(jnp.float32),
                   ((0, 0), (0, last_pad - last_dim)))
    inputs.append(wf_t)
    inputs.append(bf_p)
    assert wf_t.shape[0] == d_total

    grid = (b_pad // tb,)
    in_specs = [pl.BlockSpec((tb, n_input), lambda i: (i, 0))]   # batch-tiled x
    for a in inputs[1:]:
        in_specs.append(pl.BlockSpec(a.shape, lambda i: (0, 0)))  # resident weights
    out_spec = pl.BlockSpec((tb, last_pad), lambda i: (i, 0))     # lane-dense out

    kernel = make_densenet_kernel(n_layers, compute_dtype)

    out = pl.pallas_call(
        kernel,
        out_shape=jax.ShapeDtypeStruct((b_pad, last_pad), out_store_dtype),
        grid=grid,
        in_specs=in_specs,
        out_specs=out_spec,
        compiler_params=pltpu.CompilerParams(
            dimension_semantics=("parallel",)),
    )(*inputs)
    return out[:B, :last_dim].astype(jnp.float32)


# --------------------------------------------------------- parameter setup ---

def xavier_uniform(key, shape):
    # nn.init.xavier_uniform_ on a (fan_out, fan_in) weight
    fan_out, fan_in = shape
    a = math.sqrt(6.0 / float(fan_in + fan_out))
    return jax.random.uniform(key, shape, jnp.float32, minval=-a, maxval=a)


def xavier_bias(key, n_out):
    # _xavier_override(bias, n_out, n_out): a = sqrt(3) * sqrt(2 / (2*n_out))
    a = math.sqrt(3.0) * math.sqrt(2.0 / float(2 * n_out))
    return jax.random.uniform(key, (n_out,), jnp.float32, minval=-a, maxval=a)


def init_densenet_params(key, n_input, n_hidden, n_layers, last_dim):
    dense_params = []
    in_dim = n_input
    for _ in range(n_layers):
        key, kw, kb = jax.random.split(key, 3)
        dense_params.append((xavier_uniform(kw, (n_hidden, in_dim)),
                             xavier_bias(kb, n_hidden)))
        in_dim += n_hidden
    key, kw, kb = jax.random.split(key, 3)
    final_params = (xavier_uniform(kw, (last_dim, in_dim)),
                    xavier_bias(kb, last_dim))
    return dense_params, final_params


# -------------------------------------------------------- pure-JAX reference -

def densenet_reference(x, dense_params, final_params, n_layers,
                       matmul_dtype=jnp.float32):
    """Reference with the same dtype path as the kernel (matmul operands cast
    to `matmul_dtype`, f32 accumulation, f32 elementwise)."""
    x = x.reshape(x.shape[0], -1).astype(jnp.float32)
    for i in range(n_layers):
        w, b = dense_params[i]
        y = jnp.dot(x.astype(matmul_dtype), w.T.astype(matmul_dtype),
                    preferred_element_type=jnp.float32) + b
        y = jnp.maximum(y, 0.0)
        x = jnp.concatenate([y, x], axis=1)
    wf, bf = final_params
    z = jnp.dot(x.astype(matmul_dtype), wf.T.astype(matmul_dtype),
                preferred_element_type=jnp.float32) + bf
    return jnp.tanh(z)


# -------------------------------------------------------------------- main ---

if __name__ == "__main__":
    n_input, n_hidden, n_layers, last_dim = 32, 32, 3, 16

    key = jax.random.PRNGKey(0)
    key, kx, kp = jax.random.split(key, 3)

    dense_params, final_params = init_densenet_params(
        kp, n_input, n_hidden, n_layers, last_dim)

    # Case 1: input shaped (8, 2, 4, 4) — flattened to (8, 32) in the wrapper,
    # mirroring `x.view(len(x), -1)`.  Single grid step (batch too small to split).
    B = 8
    x = jax.random.normal(kx, (B, 2, 4, 4), jnp.float32)
    out = densenet_forward(x, dense_params, final_params,
                           n_input, n_hidden, n_layers, last_dim)
    out = jax.block_until_ready(out)
    assert out.shape == (B, last_dim)

    ref_bf16 = densenet_reference(x, dense_params, final_params, n_layers,
                                  matmul_dtype=jnp.bfloat16)
    ref_f32 = densenet_reference(x, dense_params, final_params, n_layers,
                                 matmul_dtype=jnp.float32)
    # Output is stored in bf16 (tanh in [-1,1] -> abs rounding error ~2e-3).
    assert jnp.allclose(out, ref_bf16, atol=1e-2, rtol=1e-2)
    assert jnp.allclose(out, ref_f32, atol=5e-2)

    # Case 2: batch not a multiple of the tile — exercises batch padding and a
    # multi-step "parallel" batch grid (grid=(4,), tb=16).
    key, kx2 = jax.random.split(key)
    B2 = 50
    x2 = jax.random.normal(kx2, (B2, n_input), jnp.float32)
    out2 = densenet_forward(x2, dense_params, final_params,
                            n_input, n_hidden, n_layers, last_dim, block_b=16)
    out2 = jax.block_until_ready(out2)
    ref2 = densenet_reference(x2, dense_params, final_params, n_layers,
                              matmul_dtype=jnp.bfloat16)
    assert out2.shape == (B2, last_dim)
    assert jnp.allclose(out2, ref2, atol=1e-2, rtol=1e-2)

    # Case 3: B fits in one block_b tile but is big enough to split — exercises
    # the forced >=2-grid-step path (v7x dual-TensorCore sharding).
    key, kx3 = jax.random.split(key)
    B3 = 200
    x3 = jax.random.normal(kx3, (B3, n_input), jnp.float32)
    out3 = densenet_forward(x3, dense_params, final_params,
                            n_input, n_hidden, n_layers, last_dim)
    out3 = jax.block_until_ready(out3)
    ref3 = densenet_reference(x3, dense_params, final_params, n_layers,
                              matmul_dtype=jnp.bfloat16)
    assert out3.shape == (B3, last_dim)
    assert jnp.allclose(out3, ref3, atol=1e-2, rtol=1e-2)

    print("KERNEL_OK")
</pallas_src>

<mosaic_0001>
module attributes {stable_mosaic.version = 11 : i64} {
  func.func @kernel(%arg0: i32, %arg1: memref<16x32xbf16, #tpu.memory_space<vmem>>, %arg2: memref<32x32xbf16, #tpu.memory_space<vmem>>, %arg3: memref<1x32xf32, #tpu.memory_space<vmem>>, %arg4: memref<64x32xbf16, #tpu.memory_space<vmem>>, %arg5: memref<1x32xf32, #tpu.memory_space<vmem>>, %arg6: memref<96x32xbf16, #tpu.memory_space<vmem>>, %arg7: memref<1x32xf32, #tpu.memory_space<vmem>>, %arg8: memref<128x128xbf16, #tpu.memory_space<vmem>>, %arg9: memref<1x128xf32, #tpu.memory_space<vmem>>, %arg10: memref<16x128xbf16, #tpu.memory_space<vmem>>) attributes {dimension_semantics = [#tpu.dimension_semantics<parallel>], iteration_bounds = array<i64: 1>, scalar_prefetch = 0 : i64, scratch_operands = 0 : i64, tpu.core_type = #tpu.core_type<tc>, window_params = [{transform_indices = @transform_0, window_bounds = array<i64: 16, 32>}, {pipeline_mode = #tpu.pipeline_mode<synchronous>, transform_indices = @transform_1, window_bounds = array<i64: 32, 32>}, {pipeline_mode = #tpu.pipeline_mode<synchronous>, transform_indices = @transform_2, window_bounds = array<i64: 1, 32>}, {pipeline_mode = #tpu.pipeline_mode<synchronous>, transform_indices = @transform_3, window_bounds = array<i64: 64, 32>}, {pipeline_mode = #tpu.pipeline_mode<synchronous>, transform_indices = @transform_4, window_bounds = array<i64: 1, 32>}, {pipeline_mode = #tpu.pipeline_mode<synchronous>, transform_indices = @transform_5, window_bounds = array<i64: 96, 32>}, {pipeline_mode = #tpu.pipeline_mode<synchronous>, transform_indices = @transform_6, window_bounds = array<i64: 1, 32>}, {pipeline_mode = #tpu.pipeline_mode<synchronous>, transform_indices = @transform_7, window_bounds = array<i64: 128, 128>}, {pipeline_mode = #tpu.pipeline_mode<synchronous>, transform_indices = @transform_8, window_bounds = array<i64: 1, 128>}, {transform_indices = @transform_9, window_bounds = array<i64: 16, 128>}]} {
    %c0 = arith.constant 0 : index
    %c0_0 = arith.constant 0 : index
    %0 = vector.load %arg1[%c0, %c0_0] : memref<16x32xbf16, #tpu.memory_space<vmem>>, vector<16x32xbf16>
    %c0_1 = arith.constant 0 : index
    %c0_2 = arith.constant 0 : index
    %1 = vector.load %arg2[%c0_1, %c0_2] : memref<32x32xbf16, #tpu.memory_space<vmem>>, vector<32x32xbf16>
    %cst = arith.constant dense<0.000000e+00> : vector<16x32xf32>
    %2 = tpu.matmul %0, %1, %cst {dimension_numbers = #tpu.dot_dimension_numbers<[1], [0], [0], [1], [0, 0, 1, 1], [], []>} : vector<16x32xbf16>, vector<32x32xbf16>, vector<16x32xf32> -> vector<16x32xf32>
    %c0_3 = arith.constant 0 : index
    %c0_4 = arith.constant 0 : index
    %3 = vector.load %arg3[%c0_3, %c0_4] : memref<1x32xf32, #tpu.memory_space<vmem>>, vector<1x32xf32>
    %4 = vector.broadcast %3 : vector<1x32xf32> to vector<16x32xf32>
    %5 = arith.addf %2, %4 : vector<16x32xf32>
    %cst_5 = arith.constant 0.000000e+00 : f32
    %6 = vector.broadcast %cst_5 : f32 to vector<16x32xf32>
    %7 = arith.maximumf %5, %6 : vector<16x32xf32>
    %8 = arith.truncf %7 : vector<16x32xf32> to vector<16x32xbf16>
    %9 = tpu.concatenate %8, %0 in 1 : vector<16x32xbf16>, vector<16x32xbf16> -> vector<16x64xbf16>
    %c0_6 = arith.constant 0 : index
    %c0_7 = arith.constant 0 : index
    %10 = vector.load %arg4[%c0_6, %c0_7] : memref<64x32xbf16, #tpu.memory_space<vmem>>, vector<64x32xbf16>
    %cst_8 = arith.constant dense<0.000000e+00> : vector<16x32xf32>
    %11 = tpu.matmul %9, %10, %cst_8 {dimension_numbers = #tpu.dot_dimension_numbers<[1], [0], [0], [1], [0, 0, 1, 1], [], []>} : vector<16x64xbf16>, vector<64x32xbf16>, vector<16x32xf32> -> vector<16x32xf32>
    %c0_9 = arith.constant 0 : index
    %c0_10 = arith.constant 0 : index
    %12 = vector.load %arg5[%c0_9, %c0_10] : memref<1x32xf32, #tpu.memory_space<vmem>>, vector<1x32xf32>
    %13 = vector.broadcast %12 : vector<1x32xf32> to vector<16x32xf32>
    %14 = arith.addf %11, %13 : vector<16x32xf32>
    %cst_11 = arith.constant 0.000000e+00 : f32
    %15 = vector.broadcast %cst_11 : f32 to vector<16x32xf32>
    %16 = arith.maximumf %14, %15 : vector<16x32xf32>
    %17 = arith.truncf %16 : vector<16x32xf32> to vector<16x32xbf16>
    %18 = tpu.concatenate %17, %9 in 1 : vector<16x32xbf16>, vector<16x64xbf16> -> vector<16x96xbf16>
    %c0_12 = arith.constant 0 : index
    %c0_13 = arith.constant 0 : index
    %19 = vector.load %arg6[%c0_12, %c0_13] : memref<96x32xbf16, #tpu.memory_space<vmem>>, vector<96x32xbf16>
    %cst_14 = arith.constant dense<0.000000e+00> : vector<16x32xf32>
    %20 = tpu.matmul %18, %19, %cst_14 {dimension_numbers = #tpu.dot_dimension_numbers<[1], [0], [0], [1], [0, 0, 1, 1], [], []>} : vector<16x96xbf16>, vector<96x32xbf16>, vector<16x32xf32> -> vector<16x32xf32>
    %c0_15 = arith.constant 0 : index
    %c0_16 = arith.constant 0 : index
    %21 = vector.load %arg7[%c0_15, %c0_16] : memref<1x32xf32, #tpu.memory_space<vmem>>, vector<1x32xf32>
    %22 = vector.broadcast %21 : vector<1x32xf32> to vector<16x32xf32>
    %23 = arith.addf %20, %22 : vector<16x32xf32>
    %cst_17 = arith.constant 0.000000e+00 : f32
    %24 = vector.broadcast %cst_17 : f32 to vector<16x32xf32>
    %25 = arith.maximumf %23, %24 : vector<16x32xf32>
    %26 = arith.truncf %25 : vector<16x32xf32> to vector<16x32xbf16>
    %27 = tpu.concatenate %26, %18 in 1 : vector<16x32xbf16>, vector<16x96xbf16> -> vector<16x128xbf16>
    %c0_18 = arith.constant 0 : index
    %c0_19 = arith.constant 0 : index
    %28 = vector.load %arg8[%c0_18, %c0_19] : memref<128x128xbf16, #tpu.memory_space<vmem>>, vector<128x128xbf16>
    %cst_20 = arith.constant dense<0.000000e+00> : vector<16x128xf32>
    %29 = tpu.matmul %27, %28, %cst_20 {dimension_numbers = #tpu.dot_dimension_numbers<[1], [0], [0], [1], [0, 0, 1, 1], [], []>} : vector<16x128xbf16>, vector<128x128xbf16>, vector<16x128xf32> -> vector<16x128xf32>
    %c0_21 = arith.constant 0 : index
    %c0_22 = arith.constant 0 : index
    %30 = vector.load %arg9[%c0_21, %c0_22] : memref<1x128xf32, #tpu.memory_space<vmem>>, vector<1x128xf32>
    %31 = vector.broadcast %30 : vector<1x128xf32> to vector<16x128xf32>
    %32 = arith.addf %29, %31 : vector<16x128xf32>
    %33 = math.tanh %32 : vector<16x128xf32>
    %34 = arith.truncf %33 : vector<16x128xf32> to vector<16x128xbf16>
    %c0_23 = arith.constant 0 : index
    %c0_24 = arith.constant 0 : index
    %35 = vector.load %arg10[%c0_23, %c0_24] : memref<16x128xbf16, #tpu.memory_space<vmem>>, vector<16x128xbf16>
    tpu.vector_store %arg10[%c0_23, %c0_24], %34 {strides = array<i32>} : memref<16x128xbf16, #tpu.memory_space<vmem>>, vector<16x128xbf16>,
    return
  }
  func.func @transform_0(%arg0: i32) -> (i32, i32) {
    %c0_i32 = arith.constant 0 : i32
    %c0_i32_0 = arith.constant 0 : i32
    return %arg0, %c0_i32 : i32, i32
  }
  func.func @transform_1(%arg0: i32) -> (i32, i32) {
    %c0_i32 = arith.constant 0 : i32
    %c0_i32_0 = arith.constant 0 : i32
    %c0_i32_1 = arith.constant 0 : i32
    return %c0_i32, %c0_i32_0 : i32, i32
  }
  func.func @transform_2(%arg0: i32) -> (i32, i32) {
    %c0_i32 = arith.constant 0 : i32
    %c0_i32_0 = arith.constant 0 : i32
    %c0_i32_1 = arith.constant 0 : i32
    return %c0_i32, %c0_i32_0 : i32, i32
  }
  func.func @transform_3(%arg0: i32) -> (i32, i32) {
    %c0_i32 = arith.constant 0 : i32
    %c0_i32_0 = arith.constant 0 : i32
    %c0_i32_1 = arith.constant 0 : i32
    return %c0_i32, %c0_i32_0 : i32, i32
  }
  func.func @transform_4(%arg0: i32) -> (i32, i32) {
    %c0_i32 = arith.constant 0 : i32
    %c0_i32_0 = arith.constant 0 : i32
    %c0_i32_1 = arith.constant 0 : i32
    return %c0_i32, %c0_i32_0 : i32, i32
  }
  func.func @transform_5(%arg0: i32) -> (i32, i32) {
    %c0_i32 = arith.constant 0 : i32
    %c0_i32_0 = arith.constant 0 : i32
    %c0_i32_1 = arith.constant 0 : i32
    return %c0_i32, %c0_i32_0 : i32, i32
  }
  func.func @transform_6(%arg0: i32) -> (i32, i32) {
    %c0_i32 = arith.constant 0 : i32
    %c0_i32_0 = arith.constant 0 : i32
    %c0_i32_1 = arith.constant 0 : i32
    return %c0_i32, %c0_i32_0 : i32, i32
  }
  func.func @transform_7(%arg0: i32) -> (i32, i32) {
    %c0_i32 = arith.constant 0 : i32
    %c0_i32_0 = arith.constant 0 : i32
    %c0_i32_1 = arith.constant 0 : i32
    return %c0_i32, %c0_i32_0 : i32, i32
  }
  func.func @transform_8(%arg0: i32) -> (i32, i32) {
    %c0_i32 = arith.constant 0 : i32
    %c0_i32_0 = arith.constant 0 : i32
    %c0_i32_1 = arith.constant 0 : i32
    return %c0_i32, %c0_i32_0 : i32, i32
  }
  func.func @transform_9(%arg0: i32) -> (i32, i32) {
    %c0_i32 = arith.constant 0 : i32
    %c0_i32_0 = arith.constant 0 : i32
    return %arg0, %c0_i32 : i32, i32
  }
}

</mosaic_0001>

<llo_original>
// kernel: tpu_custom_call.1
$region0: #{tpu_custom_call.1}
  #allocation0 [shape = 'u32[]', space=smem, size = 0x4, offset = 0x4, fixed_abs, tag = 'smem constant byte address 0x4 - core index']
  #allocation1 [shape = 'u32[72,128]{1,0:T(1,128)}', space=vmem, size = 0x9000, scoped, tag = 'internal scratch']
  %s0 = inlined_call_operand.vmem [shape: bf16[16,32], index: 0, kind: input, shape index: {}]
  %s1 = inlined_call_operand.vmem [shape: bf16[32,32], index: 1, kind: input, shape index: {}]
  %s2 = inlined_call_operand.vmem [shape: f32[1,32], index: 2, kind: input, shape index: {}]
  %s3 = inlined_call_operand.vmem [shape: bf16[64,32], index: 3, kind: input, shape index: {}]
  %s4 = inlined_call_operand.vmem [shape: f32[1,32], index: 4, kind: input, shape index: {}]
  %s5 = inlined_call_operand.vmem [shape: bf16[96,32], index: 5, kind: input, shape index: {}]
  %s6 = inlined_call_operand.vmem [shape: f32[1,32], index: 6, kind: input, shape index: {}]
  %s7 = inlined_call_operand.vmem [shape: bf16[128,128], index: 7, kind: input, shape index: {}]
  %s8 = inlined_call_operand.vmem [shape: f32[1,128], index: 8, kind: input, shape index: {}]
  %s9 = inlined_call_operand.hbm [shape: bf16[16,128], index: 9, kind: output, shape index: {}]
  %s10 = sld [smem:[#allocation0]]
  $region46: #{tpu_custom_call.1} parent=0
    _
  %s12 = ssub.s32 1, %s10
  %s13 = scalar_select 0, %s12, %s10
  $region1: #{tpu_custom_call.1} parent=0
    #allocation2 [shape = 'u8[4096]{0}', space=vmem, size = 0x1000, scoped, tag = 'output window, operand 0, single buffered']
    #allocation3 [shape = 's32[1]{0}', space=sflag, size = 0x4, scoped, tag = 'scoped memory for tpu_custom_call.1']
    %14 = vsyncpa [#allocation3], 0
    // Predicated region
    $region2: #{tpu_custom_call.1} parent=1 // pred_check
      _
    $region3: #{tpu_custom_call.1} parent=1 // pred_check_branch
      %16 = sbr.rel (0) target = $region5
    $region4: #{tpu_custom_call.1} parent=1 // pred_region
      _
    $region5: #{tpu_custom_call.1} parent=1 // pred_fallthru
      _
    // Predicated region
    $region6: #{tpu_custom_call.1} parent=1 // pred_check
      _
    $region7: #{tpu_custom_call.1} parent=1 // pred_check_branch
      %18 = sbr.rel (0) target = $region9
    $region8: #{tpu_custom_call.1} parent=1 // pred_region
      _
    $region9: #{tpu_custom_call.1} parent=1 // pred_fallthru
      _
    // Predicated region
    $region10: #{tpu_custom_call.1} parent=1 // pred_check
      _
    $region11: #{tpu_custom_call.1} parent=1 // pred_check_branch
      %20 = sbr.rel (0) target = $region13
    $region12: #{tpu_custom_call.1} parent=1 // pred_region
      _
    $region13: #{tpu_custom_call.1} parent=1 // pred_fallthru
      _
    // Predicated region
    $region14: #{tpu_custom_call.1} parent=1 // pred_check
      _
    $region15: #{tpu_custom_call.1} parent=1 // pred_check_branch
      %22 = sbr.rel (0) target = $region17
    $region16: #{tpu_custom_call.1} parent=1 // pred_region
      _
    $region17: #{tpu_custom_call.1} parent=1 // pred_fallthru
      _
    // Predicated region
    $region18: #{tpu_custom_call.1} parent=1 // pred_check
      _
    $region19: #{tpu_custom_call.1} parent=1 // pred_check_branch
      %24 = sbr.rel (0) target = $region21
    $region20: #{tpu_custom_call.1} parent=1 // pred_region
      _
    $region21: #{tpu_custom_call.1} parent=1 // pred_fallthru
      _
    // Predicated region
    $region22: #{tpu_custom_call.1} parent=1 // pred_check
      _
    $region23: #{tpu_custom_call.1} parent=1 // pred_check_branch
      %26 = sbr.rel (0) target = $region25
    $region24: #{tpu_custom_call.1} parent=1 // pred_region
      _
    $region25: #{tpu_custom_call.1} parent=1 // pred_fallthru
      _
    // Predicated region
    $region26: #{tpu_custom_call.1} parent=1 // pred_check
      _
    $region27: #{tpu_custom_call.1} parent=1 // pred_check_branch
      %28 = sbr.rel (0) target = $region29
    $region28: #{tpu_custom_call.1} parent=1 // pred_region
      _
    $region29: #{tpu_custom_call.1} parent=1 // pred_fallthru
      _
    // Predicated region
    $region30: #{tpu_custom_call.1} parent=1 // pred_check
      _
    $region31: #{tpu_custom_call.1} parent=1 // pred_check_branch
      %30 = sbr.rel (0) target = $region33
    $region32: #{tpu_custom_call.1} parent=1 // pred_region
      _
    $region33: #{tpu_custom_call.1} parent=1 // pred_fallthru
      _
    // Predicated region
    $region34: #{tpu_custom_call.1} parent=1 // pred_check
      _
    $region35: #{tpu_custom_call.1} parent=1 // pred_check_branch
      %32 = sbr.rel (0) target = $region37
    $region36: #{tpu_custom_call.1} parent=1 // pred_region
      _
    $region37: #{tpu_custom_call.1} parent=1 // pred_fallthru
      _
    %v34 = vld [vmem:[%s0] sm:$0xf]
    %v35 = vld [vmem:[%s0 + $0x4] sm:$0xf]
    %v36 = vld [vmem:[%s1] sm:$0xf]
    %v37 = vld [vmem:[%s1 + $0x4] sm:$0xf]
    %v38 = vld [vmem:[%s1 + $0x8] sm:$0xf]
    %v39 = vld [vmem:[%s1 + $0xc] sm:$0xf]
    %v40 = vld [vmem:[%s2] sm:$0x1]
    %v42 = vperm.slane %v40, 0
    %v46 = vunpack.c.l.b16 %v34
    %v47 = vunpack.c.l.b16 %v35
    %v48 = vpack.c.b16 %v47, %v46
    %v53 = vunpack.c.l.b16 %v36
    %v54 = vunpack.c.l.b16 %v37
    %v55 = vunpack.c.l.b16 %v38
    %v56 = vunpack.c.l.b16 %v39
    %v57 = vpack.c.b16 %v54, %v53
    %v58 = vpack.c.b16 %v56, %v55
    %vm61 = vcmask 261120
    %v63 = vsel %vm61, %v48, 0
    %65 = vmatpush.bf16.msra.mxu0 0
    %66 = vmatpush.bf16.msra.mxu0 0
    %67 = vmatpush.bf16.msra.mxu0 0
    %68 = vmatpush.bf16.msra.mxu0 0
    %69 = vmatpush.bf16.msra.mxu0 0
    %70 = vmatpush.bf16.msra.mxu0 0
    %71 = vmatpush.bf16.msra.mxu0 %v58
    %72 = vmatpush.bf16.msra.mxu0 %v57
    %73 = vmatmul.bf16.gmra.mxu0 %v63
    %v74 = vpop.f32.mrf.mxu0
    %v75 = vadd.f32 %v42, %v74
    %v76 = vpop.f32.mrf.mxu0
    %v77 = vadd.f32 %v42, %v76
    %78 = vdwg.mxu0
    %v79 = vmax.f32 %v75, 0.0
    %v80 = vmax.f32 %v77, 0.0
    %v81 = vpack.c.bf16 %v79, %v79
    %v82 = vpack.c.bf16 %v80, %v80
    %v85 = vunpack.c.l.b16 %v81
    %v86 = vunpack.c.l.b16 %v82
    %v87 = vpack.c.b16 %v86, %v85
    %88 = vrot.lane.b32.xlu0 %v48, 32
    %v89 = vpop.permute.xlu0 %88
    %v92 = vsel %vm61, %v87, %v89
    %v93 = vld [vmem:[%s3] sm:$0xf]
    %v94 = vld [vmem:[%s3 + $0x4] sm:$0xf]
    %v95 = vld [vmem:[%s3 + $0x8] sm:$0xf]
    %v96 = vld [vmem:[%s3 + $0xc] sm:$0xf]
    %v97 = vld [vmem:[%s3 + $0x10] sm:$0xf]
    %v98 = vld [vmem:[%s3 + $0x14] sm:$0xf]
    %v99 = vld [vmem:[%s3 + $0x18] sm:$0xf]
    %v100 = vld [vmem:[%s3 + $0x1c] sm:$0xf]
    %v101 = vld [vmem:[%s4] sm:$0x1]
    %v103 = vperm.slane %v101, 0
    %v113 = vunpack.c.l.b16 %v93
    %v114 = vunpack.c.l.b16 %v94
    %v115 = vunpack.c.l.b16 %v95
    %v116 = vunpack.c.l.b16 %v96
    %v117 = vunpack.c.l.b16 %v97
    %v118 = vunpack.c.l.b16 %v98
    %v119 = vunpack.c.l.b16 %v99
    %v120 = vunpack.c.l.b16 %v100
    %v121 = vpack.c.b16 %v114, %v113
    %v122 = vpack.c.b16 %v116, %v115
    %v123 = vpack.c.b16 %v118, %v117
    %v124 = vpack.c.b16 %v120, %v119
    %vm129 = vcmask 523264
    %v130 = vsel %vm129, %v92, 0
    %132 = vmatpush.bf16.msra.mxu0 0
    %133 = vmatpush.bf16.msra.mxu0 0
    %134 = vmatpush.bf16.msra.mxu0 0
    %135 = vmatpush.bf16.msra.mxu0 0
    %136 = vmatpush.bf16.msra.mxu0 %v124
    %137 = vmatpush.bf16.msra.mxu0 %v123
    %138 = vmatpush.bf16.msra.mxu0 %v122
    %139 = vmatpush.bf16.msra.mxu0 %v121
    %140 = vmatmul.bf16.gmra.mxu0 %v130
    %v141 = vpop.f32.mrf.mxu0
    %v142 = vadd.f32 %v103, %v141
    %v143 = vpop.f32.mrf.mxu0
    %v144 = vadd.f32 %v103, %v143
    %145 = vdwg.mxu0
    %v146 = vmax.f32 %v142, 0.0
    %v147 = vmax.f32 %v144, 0.0
    %v148 = vpack.c.bf16 %v146, %v146
    %v149 = vpack.c.bf16 %v147, %v147
    %v152 = vunpack.c.l.b16 %v148
    %v153 = vunpack.c.l.b16 %v149
    %v154 = vpack.c.b16 %v153, %v152
    %156 = vrot.lane.b32.xlu0 %v92, 32
    %v157 = vpop.permute.xlu0 %156
    %v160 = vsel %vm61, %v154, %v157
    %v161 = vld [vmem:[%s5] sm:$0xf]
    %v162 = vld [vmem:[%s5 + $0x4] sm:$0xf]
    %v163 = vld [vmem:[%s5 + $0x8] sm:$0xf]
    %v164 = vld [vmem:[%s5 + $0xc] sm:$0xf]
    %v165 = vld [vmem:[%s5 + $0x10] sm:$0xf]
    %v166 = vld [vmem:[%s5 + $0x14] sm:$0xf]
    %v167 = vld [vmem:[%s5 + $0x18] sm:$0xf]
    %v168 = vld [vmem:[%s5 + $0x1c] sm:$0xf]
    %v169 = vld [vmem:[%s5 + $0x20] sm:$0xf]
    %v170 = vld [vmem:[%s5 + $0x24] sm:$0xf]
    %v171 = vld [vmem:[%s5 + $0x28] sm:$0xf]
    %v172 = vld [vmem:[%s5 + $0x2c] sm:$0xf]
    %v173 = vld [vmem:[%s6] sm:$0x1]
    %v175 = vperm.slane %v173, 0
    %v189 = vunpack.c.l.b16 %v161
    %v190 = vunpack.c.l.b16 %v162
    %v191 = vunpack.c.l.b16 %v163
    %v192 = vunpack.c.l.b16 %v164
    %v193 = vunpack.c.l.b16 %v165
    %v194 = vunpack.c.l.b16 %v166
    %v195 = vunpack.c.l.b16 %v167
    %v196 = vunpack.c.l.b16 %v168
    %v197 = vunpack.c.l.b16 %v169
    %v198 = vunpack.c.l.b16 %v170
    %v199 = vunpack.c.l.b16 %v171
    %v200 = vunpack.c.l.b16 %v172
    %v201 = vpack.c.b16 %v190, %v189
    %v202 = vpack.c.b16 %v192, %v191
    %v203 = vpack.c.b16 %v194, %v193
    %v204 = vpack.c.b16 %v196, %v195
    %v205 = vpack.c.b16 %v198, %v197
    %v206 = vpack.c.b16 %v200, %v199
    %vm213 = vcmask 785408
    %v214 = vsel %vm213, %v160, 0
    %216 = vmatpush.bf16.msra.mxu0 0
    %217 = vmatpush.bf16.msra.mxu0 0
    %218 = vmatpush.bf16.msra.mxu0 %v206
    %219 = vmatpush.bf16.msra.mxu0 %v205
    %220 = vmatpush.bf16.msra.mxu0 %v204
    %221 = vmatpush.bf16.msra.mxu0 %v203
    %222 = vmatpush.bf16.msra.mxu0 %v202
    %223 = vmatpush.bf16.msra.mxu0 %v201
    %224 = vmatmul.bf16.gmra.mxu0 %v214
    %v225 = vpop.f32.mrf.mxu0
    %v226 = vadd.f32 %v175, %v225
    %v227 = vpop.f32.mrf.mxu0
    %v228 = vadd.f32 %v175, %v227
    %229 = vdwg.mxu0
    %v230 = vmax.f32 %v226, 0.0
    %v231 = vmax.f32 %v228, 0.0
    %v232 = vpack.c.bf16 %v230, %v230
    %v233 = vpack.c.bf16 %v231, %v231
    %v236 = vunpack.c.l.b16 %v232
    %v237 = vunpack.c.l.b16 %v233
    %v238 = vpack.c.b16 %v237, %v236
    %240 = vrot.lane.b32.xlu0 %v160, 32
    %v241 = vpop.permute.xlu0 %240
    %v244 = vsel %vm61, %v238, %v241
    %v246 = vld [vmem:[%s7] sm:$0xf]
    %v247 = vld [vmem:[%s7 + $0x4] sm:$0xf]
    %v248 = vld [vmem:[%s7 + $0x8] sm:$0xf]
    %v249 = vld [vmem:[%s7 + $0xc] sm:$0xf]
    %v250 = vld [vmem:[%s7 + $0x10] sm:$0xf]
    %v251 = vld [vmem:[%s7 + $0x14] sm:$0xf]
    %v252 = vld [vmem:[%s7 + $0x18] sm:$0xf]
    %v253 = vld [vmem:[%s7 + $0x1c] sm:$0xf]
    %v254 = vld [vmem:[%s7 + $0x20] sm:$0xf]
    %v255 = vld [vmem:[%s7 + $0x24] sm:$0xf]
    %v256 = vld [vmem:[%s7 + $0x28] sm:$0xf]
    %v257 = vld [vmem:[%s7 + $0x2c] sm:$0xf]
    %v258 = vld [vmem:[%s7 + $0x30] sm:$0xf]
    %v259 = vld [vmem:[%s7 + $0x34] sm:$0xf]
    %v260 = vld [vmem:[%s7 + $0x38] sm:$0xf]
    %v261 = vld [vmem:[%s7 + $0x3c] sm:$0xf]
    %v262 = vld [vmem:[%s8] sm:$0x1]
    %v264 = vperm.slane %v262, 0
    %v282 = vunpack.c.l.b16 %v246
    %v283 = vunpack.c.l.b16 %v247
    %v284 = vunpack.c.l.b16 %v248
    %v285 = vunpack.c.l.b16 %v249
    %v286 = vunpack.c.l.b16 %v250
    %v287 = vunpack.c.l.b16 %v251
    %v288 = vunpack.c.l.b16 %v252
    %v289 = vunpack.c.l.b16 %v253
    %v290 = vunpack.c.l.b16 %v254
    %v291 = vunpack.c.l.b16 %v255
    %v292 = vunpack.c.l.b16 %v256
    %v293 = vunpack.c.l.b16 %v257
    %v294 = vunpack.c.l.b16 %v258
    %v295 = vunpack.c.l.b16 %v259
    %v296 = vunpack.c.l.b16 %v260
    %v297 = vunpack.c.l.b16 %v261
    %v298 = vpack.c.b16 %v283, %v282
    %v299 = vpack.c.b16 %v285, %v284
    %v300 = vpack.c.b16 %v287, %v286
    %v301 = vpack.c.b16 %v289, %v288
    %v302 = vpack.c.b16 %v291, %v290
    %v303 = vpack.c.b16 %v293, %v292
    %v304 = vpack.c.b16 %v295, %v294
    %v305 = vpack.c.b16 %v297, %v296
    %314 = vmatpush.bf16.msra.mxu0 %v305
    %315 = vmatpush.bf16.msra.mxu0 %v304
    %316 = vmatpush.bf16.msra.mxu0 %v303
    %317 = vmatpush.bf16.msra.mxu0 %v302
    %318 = vmatpush.bf16.msra.mxu0 %v301
    %319 = vmatpush.bf16.msra.mxu0 %v300
    %320 = vmatpush.bf16.msra.mxu0 %v299
    %321 = vmatpush.bf16.msra.mxu0 %v298
    %322 = vmatmul.bf16.gmra.mxu0 %v244
    %v323 = vpop.f32.mrf.mxu0
    %v324 = vadd.f32 %v264, %v323
    %v325 = vpop.f32.mrf.mxu0
    %v326 = vadd.f32 %v264, %v325
    %327 = vdwg.mxu0
    %v328 = vtanh.pop %v324
    %v329 = vtanh.pop %v326
    %v330 = vpack.c.bf16 %v328, %v328
    %v331 = vpack.c.bf16 %v329, %v329
    %332 = vst [vmem:[#allocation2] sm:$0xf] %v330
    %333 = vst [vmem:[#allocation2 + $0x4] sm:$0xf] %v331
    // Predicated region
    $region38: #{tpu_custom_call.1} parent=1 // pred_check
      _
    $region39: #{tpu_custom_call.1} parent=1 // pred_check_branch
      %335 = sbr.rel (0) target = $region41
    $region40: #{tpu_custom_call.1} parent=1 // pred_region
      %337 = vsyncadd [#allocation3], 0
      %s338 = sshll.u32 [#allocation2], 4
      %s339 = int_to_ptr.vmem [resolvable:$true] %s338
      %s340 = sshll.u32 %s9, 4
      %s341 = int_to_ptr.hbm [resolvable:$true] %s340
      %346 = dma.vmem_to_hbm [thread:$0]  %s339, 128, %s341, [#allocation3], 64, 64, 4
    $region41: #{tpu_custom_call.1} parent=1 // pred_fallthru
      _
    // Predicated region
    $region42: #{tpu_custom_call.1} parent=1 // pred_check
      _
    $region43: #{tpu_custom_call.1} parent=1 // pred_check_branch
      %348 = sbr.rel (0) target = $region45
    $region44: #{tpu_custom_call.1} parent=1 // pred_region
      %350 = dma.done [#allocation3], 128
    $region45: #{tpu_custom_call.1} parent=1 // pred_fallthru
      _
    %351 = vsyncpa [#allocation3], 1

</llo_original>
